<compile_context>
chip_gen: v7x
topology: tpu7x:2x2x1
jax: 0.10.0
libtpu: 0.0.40
codegen_flags: <defaults>
</compile_context>

<pallas_src>
import jax
import jax.numpy as jnp
from jax import lax
from jax.experimental import pallas as pl
from jax.experimental.pallas import tpu as pltpu


def _round_up(x, m):
    return ((x + m - 1) // m) * m


def _default_act_dtype():
    """bf16 elementwise only on chips with a bf16 VPU/EUP (v6e / v7x)."""
    try:
        kind = jax.devices()[0].device_kind.lower()
    except Exception:
        return jnp.float32
    if any(tag in kind for tag in ("v6", "v7", "7x")):
        return jnp.bfloat16
    return jnp.float32


# Contract the last dim of both operands: (M, K) x (N, K) -> (M, N).
_NT_DIMS = (((1,), (1,)), ((), ()))


def _make_kernel(chunk, n_full, rem, dot_dtype, act_dtype):
    def kernel(x_ref, w1_ref, b1_ref, w2_ref, b2_ref, w3_ref, b3_ref, v_ref):
        # Weights / biases are tiny, VMEM-resident; load + cast once per tile
        # (hoisted out of the chunk loop).
        w1 = w1_ref[...]                          # (H1, D) f32 (layer-1 MXU is idle at K=D)
        w2 = w2_ref[...].astype(dot_dtype)        # (H2, H1)
        w3 = w3_ref[...].astype(dot_dtype)        # (1,  H2)
        b1 = b1_ref[...].astype(act_dtype)        # (H1, 1)
        b2 = b2_ref[...].astype(act_dtype)        # (H2, 1)
        b3 = b3_ref[...]                          # (1, 1) f32
        h1_dim = w1.shape[0]
        h2_dim = w2.shape[0]

        def value_chunk(start, size, b1b, b2b):
            # x slab: (size, D) with batch on sublanes.  NT dot_general puts
            # the result batch-on-lanes without a separate transpose pass.
            xc = x_ref[pl.ds(start, size), :]
            z1 = lax.dot_general(w1, xc, _NT_DIMS,
                                 preferred_element_type=jnp.float32)    # (H1, size)
            a1 = jnp.tanh(z1.astype(act_dtype) + b1b)
            z2 = jnp.dot(w2, a1.astype(dot_dtype),
                         preferred_element_type=jnp.float32)            # (H2, size)
            a2 = jnp.tanh(z2.astype(act_dtype) + b2b)
            v = jnp.dot(w3, a2.astype(dot_dtype),
                        preferred_element_type=jnp.float32) + b3        # (1, size)
            v_ref[:, pl.ds(start, size)] = v.astype(v_ref.dtype)

        # Hoist bias broadcasts (JAX does not CSE broadcast_in_dim in loops).
        b1c = jnp.broadcast_to(b1, (h1_dim, chunk))
        b2c = jnp.broadcast_to(b2, (h2_dim, chunk))

        if n_full == 1:
            value_chunk(0, chunk, b1c, b2c)
        elif n_full > 1:
            def body(c, carry):
                value_chunk(pl.multiple_of(c * chunk, chunk), chunk, b1c, b2c)
                return carry
            lax.fori_loop(0, n_full, body, 0, unroll=(n_full <= 32))
        if rem:
            b1r = jnp.broadcast_to(b1, (h1_dim, rem))
            b2r = jnp.broadcast_to(b2, (h2_dim, rem))
            value_chunk(n_full * chunk, rem, b1r, b2r)

    return kernel


def mlp_critic_forward(obs, params, *, tile_b=16384, chunk=512,
                       dot_dtype=jnp.bfloat16, act_dtype=None):
    """obs: (B, obs_dim) float32 -> (B,) float32 values (squeezed).

    Weights are PyTorch-native: W_i (out, in), b_i (out, 1).
    """
    w1, b1, w2, b2, w3, b3 = params
    B, obs_dim = obs.shape
    h1 = w1.shape[0]
    h2 = w2.shape[0]
    if act_dtype is None:
        act_dtype = _default_act_dtype()

    # ---- batch tile selection ----------------------------------------------
    tile_cap = max(128, _round_up(int(tile_b), 128))
    b128 = _round_up(max(B, 1), 128)
    tile = min(tile_cap, b128)
    # Keep >= 2 batch tiles whenever the batch allows it so the "parallel"
    # grid axis can be split across v7x's two TensorCores (no-op on v5e/v6e).
    if b128 >= 256 and b128 <= tile:
        tile = _round_up(-(-b128 // 2), 128)
    b_pad = _round_up(B, tile)
    num_tiles = b_pad // tile

    # In-kernel chunking over the lane (batch) axis of each tile.
    chunk = max(128, _round_up(min(int(chunk), tile), 128))
    chunk = min(chunk, tile)
    n_full = tile // chunk
    rem = tile - n_full * chunk

    # Pad only the ragged batch tail (the expensive obs.T pass is gone).
    if b_pad != B:
        obs = jnp.pad(obs, ((0, b_pad - B), (0, 0)))

    # Explicit VMEM budget: the (tile, obs_dim) obs block is lane-padded to 128
    # in VMEM and the (1, tile) output block sublane-padded to 8; cap with
    # headroom for v7x's 64 MiB/TC.
    obs_buf = tile * max(128, _round_up(obs_dim, 128)) * 4
    out_buf = 8 * tile * 4
    vmem_limit = int(min(2 * (obs_buf + out_buf) + (16 << 20), 48 << 20))

    kernel = _make_kernel(chunk, n_full, rem, dot_dtype, act_dtype)
    const_map = lambda i: (0, 0)

    v_t = pl.pallas_call(
        kernel,
        out_shape=jax.ShapeDtypeStruct((1, b_pad), jnp.float32),
        grid_spec=pltpu.PrefetchScalarGridSpec(
            num_scalar_prefetch=0,
            grid=(num_tiles,),
            in_specs=[
                pl.BlockSpec((tile, obs_dim), lambda i: (i, 0)),  # obs tile (pipelined)
                pl.BlockSpec((h1, obs_dim), const_map),           # W1 (VMEM-resident)
                pl.BlockSpec((h1, 1), const_map),                 # b1
                pl.BlockSpec((h2, h1), const_map),                # W2
                pl.BlockSpec((h2, 1), const_map),                 # b2
                pl.BlockSpec((1, h2), const_map),                 # W3
                pl.BlockSpec((1, 1), const_map),                  # b3
            ],
            out_specs=pl.BlockSpec((1, tile), lambda i: (0, i)),
        ),
        compiler_params=pltpu.CompilerParams(
            dimension_semantics=("parallel",),
            vmem_limit_bytes=vmem_limit),
    )(obs, w1, b1, w2, b2, w3, b3)

    # torch.squeeze(v, -1): (1, b_pad) -> (B,)
    return v_t[0, :B]


def init_params(key, obs_dim, hidden_sizes):
    """Deterministic init matching PyTorch Linear layer shapes (out, in)."""
    sizes = [obs_dim] + list(hidden_sizes) + [1]
    params = []
    for j in range(len(sizes) - 1):
        key, kw, kb = jax.random.split(key, 3)
        bound = 1.0 / jnp.sqrt(jnp.float32(sizes[j]))
        W = jax.random.uniform(kw, (sizes[j + 1], sizes[j]), jnp.float32,
                               -bound, bound)                 # (out, in)
        b = jax.random.uniform(kb, (sizes[j + 1], 1), jnp.float32,
                               -bound, bound)                 # (out, 1)
        params += [W, b]
    return tuple(params)


def _reference(obs, params):
    w1, b1, w2, b2, w3, b3 = params
    a1 = jnp.tanh(obs @ w1.T + b1.T)
    a2 = jnp.tanh(a1 @ w2.T + b2.T)
    return jnp.squeeze(a2 @ w3.T + b3.T, axis=-1)


if __name__ == "__main__":
    key = jax.random.PRNGKey(0)

    obs_dim = 4
    hidden_sizes = (32, 32)
    params = init_params(key, obs_dim, hidden_sizes)

    # Same example observations as the PyTorch snippet: shape (3, 4).
    obs = jnp.array([[1, 2, 3, 4],
                     [5, 6, 7, 8],
                     [9, 10, 11, 12]], dtype=jnp.float32)

    # 1) Exact-semantics path (f32 dots + f32 elementwise): tight tolerance.
    v = jax.block_until_ready(
        mlp_critic_forward(obs, params,
                           dot_dtype=jnp.float32, act_dtype=jnp.float32))
    ref = _reference(obs, params)
    assert v.shape == (obs.shape[0],)
    assert jnp.allclose(v, ref, atol=1e-5, rtol=1e-4)

    # 2) f32 path on a larger batch: multi-tile grid, in-kernel chunking with a
    #    remainder chunk, and a ragged batch tail.
    key, kobs = jax.random.split(key)
    obs_big = jax.random.normal(kobs, (2000, obs_dim), jnp.float32)
    ref_big = _reference(obs_big, params)
    v_big = jax.block_until_ready(
        mlp_critic_forward(obs_big, params, tile_b=2048, chunk=768,
                           dot_dtype=jnp.float32, act_dtype=jnp.float32))
    assert v_big.shape == (2000,)
    assert jnp.allclose(v_big, ref_big, atol=1e-4, rtol=1e-4)

    # 3) Default perf path: bf16 layer-2/3 matmul operands everywhere, bf16
    #    elementwise on v6e/v7x (f32 on v5e); loose tolerance for bf16.
    v_fast = jax.block_until_ready(mlp_critic_forward(obs_big, params))
    assert v_fast.shape == (2000,)
    assert jnp.allclose(v_fast, ref_big, atol=5e-2, rtol=5e-2)

    print("KERNEL_OK")
</pallas_src>

<mosaic_0001>
module attributes {stable_mosaic.version = 11 : i64} {
  func.func @kernel(%arg0: i32, %arg1: memref<128x4xf32, #tpu.memory_space<vmem>>, %arg2: memref<32x4xf32, #tpu.memory_space<vmem>>, %arg3: memref<32x1xf32, #tpu.memory_space<vmem>>, %arg4: memref<32x32xf32, #tpu.memory_space<vmem>>, %arg5: memref<32x1xf32, #tpu.memory_space<vmem>>, %arg6: memref<1x32xf32, #tpu.memory_space<vmem>>, %arg7: memref<1x1xf32, #tpu.memory_space<vmem>>, %arg8: memref<1x128xf32, #tpu.memory_space<vmem>>) attributes {dimension_semantics = [#tpu.dimension_semantics<parallel>], iteration_bounds = array<i64: 1>, scalar_prefetch = 0 : i64, scratch_operands = 0 : i64, tpu.core_type = #tpu.core_type<tc>, window_params = [{transform_indices = @transform_0, window_bounds = array<i64: 128, 4>}, {pipeline_mode = #tpu.pipeline_mode<synchronous>, transform_indices = @transform_1, window_bounds = array<i64: 32, 4>}, {pipeline_mode = #tpu.pipeline_mode<synchronous>, transform_indices = @transform_2, window_bounds = array<i64: 32, 1>}, {pipeline_mode = #tpu.pipeline_mode<synchronous>, transform_indices = @transform_3, window_bounds = array<i64: 32, 32>}, {pipeline_mode = #tpu.pipeline_mode<synchronous>, transform_indices = @transform_4, window_bounds = array<i64: 32, 1>}, {pipeline_mode = #tpu.pipeline_mode<synchronous>, transform_indices = @transform_5, window_bounds = array<i64: 1, 32>}, {pipeline_mode = #tpu.pipeline_mode<synchronous>, transform_indices = @transform_6, window_bounds = array<i64: 1, 1>}, {transform_indices = @transform_7, window_bounds = array<i64: 1, 128>}]} {
    %c0 = arith.constant 0 : index
    %c0_0 = arith.constant 0 : index
    %0 = vector.load %arg2[%c0, %c0_0] : memref<32x4xf32, #tpu.memory_space<vmem>>, vector<32x4xf32>
    %c0_1 = arith.constant 0 : index
    %c0_2 = arith.constant 0 : index
    %1 = vector.load %arg4[%c0_1, %c0_2] : memref<32x32xf32, #tpu.memory_space<vmem>>, vector<32x32xf32>
    %c0_3 = arith.constant 0 : index
    %c0_4 = arith.constant 0 : index
    %2 = vector.load %arg6[%c0_3, %c0_4] : memref<1x32xf32, #tpu.memory_space<vmem>>, vector<1x32xf32>
    %c0_5 = arith.constant 0 : index
    %c0_6 = arith.constant 0 : index
    %3 = vector.load %arg3[%c0_5, %c0_6] : memref<32x1xf32, #tpu.memory_space<vmem>>, vector<32x1xf32>
    %c0_7 = arith.constant 0 : index
    %c0_8 = arith.constant 0 : index
    %4 = vector.load %arg5[%c0_7, %c0_8] : memref<32x1xf32, #tpu.memory_space<vmem>>, vector<32x1xf32>
    %c0_9 = arith.constant 0 : index
    %c0_10 = arith.constant 0 : index
    %5 = vector.load %arg7[%c0_9, %c0_10] : memref<1x1xf32, #tpu.memory_space<vmem>>, vector<1x1xf32>
    %6 = vector.shape_cast %3 : vector<32x1xf32> to vector<32x1xf32>
    %7 = vector.broadcast %6 : vector<32x1xf32> to vector<32x128xf32>
    %8 = vector.shape_cast %4 : vector<32x1xf32> to vector<32x1xf32>
    %9 = vector.broadcast %8 : vector<32x1xf32> to vector<32x128xf32>
    %c0_11 = arith.constant 0 : index
    %c0_12 = arith.constant 0 : index
    %10 = vector.load %arg1[%c0_11, %c0_12] : memref<128x4xf32, #tpu.memory_space<vmem>>, vector<128x4xf32>
    %cst = arith.constant dense<0.000000e+00> : vector<32x128xf32>
    %11 = tpu.matmul %0, %10, %cst {dimension_numbers = #tpu.dot_dimension_numbers<[1], [1], [0], [0], [0, 0, 1, 0], [], []>} : vector<32x4xf32>, vector<128x4xf32>, vector<32x128xf32> -> vector<32x128xf32>
    %12 = arith.addf %11, %7 : vector<32x128xf32>
    %13 = math.tanh %12 : vector<32x128xf32>
    %cst_13 = arith.constant dense<0.000000e+00> : vector<32x128xf32>
    %14 = tpu.matmul %1, %13, %cst_13 {dimension_numbers = #tpu.dot_dimension_numbers<[1], [0], [0], [1], [0, 0, 1, 1], [], []>} : vector<32x32xf32>, vector<32x128xf32>, vector<32x128xf32> -> vector<32x128xf32>
    %15 = arith.addf %14, %9 : vector<32x128xf32>
    %16 = math.tanh %15 : vector<32x128xf32>
    %cst_14 = arith.constant dense<0.000000e+00> : vector<1x128xf32>
    %17 = tpu.matmul %2, %16, %cst_14 {dimension_numbers = #tpu.dot_dimension_numbers<[1], [0], [0], [1], [0, 0, 1, 1], [], []>} : vector<1x32xf32>, vector<32x128xf32>, vector<1x128xf32> -> vector<1x128xf32>
    %18 = vector.broadcast %5 : vector<1x1xf32> to vector<1x128xf32>
    %19 = arith.addf %17, %18 : vector<1x128xf32>
    %c0_15 = arith.constant 0 : index
    %c0_16 = arith.constant 0 : index
    %20 = vector.load %arg8[%c0_15, %c0_16] : memref<1x128xf32, #tpu.memory_space<vmem>>, vector<1x128xf32>
    tpu.vector_store %arg8[%c0_15, %c0_16], %19 {strides = array<i32>} : memref<1x128xf32, #tpu.memory_space<vmem>>, vector<1x128xf32>,
    return
  }
  func.func @transform_0(%arg0: i32) -> (i32, i32) {
    %c0_i32 = arith.constant 0 : i32
    %c0_i32_0 = arith.constant 0 : i32
    return %arg0, %c0_i32 : i32, i32
  }
  func.func @transform_1(%arg0: i32) -> (i32, i32) {
    %c0_i32 = arith.constant 0 : i32
    %c0_i32_0 = arith.constant 0 : i32
    %c0_i32_1 = arith.constant 0 : i32
    return %c0_i32, %c0_i32_0 : i32, i32
  }
  func.func @transform_2(%arg0: i32) -> (i32, i32) {
    %c0_i32 = arith.constant 0 : i32
    %c0_i32_0 = arith.constant 0 : i32
    %c0_i32_1 = arith.constant 0 : i32
    return %c0_i32, %c0_i32_0 : i32, i32
  }
  func.func @transform_3(%arg0: i32) -> (i32, i32) {
    %c0_i32 = arith.constant 0 : i32
    %c0_i32_0 = arith.constant 0 : i32
    %c0_i32_1 = arith.constant 0 : i32
    return %c0_i32, %c0_i32_0 : i32, i32
  }
  func.func @transform_4(%arg0: i32) -> (i32, i32) {
    %c0_i32 = arith.constant 0 : i32
    %c0_i32_0 = arith.constant 0 : i32
    %c0_i32_1 = arith.constant 0 : i32
    return %c0_i32, %c0_i32_0 : i32, i32
  }
  func.func @transform_5(%arg0: i32) -> (i32, i32) {
    %c0_i32 = arith.constant 0 : i32
    %c0_i32_0 = arith.constant 0 : i32
    %c0_i32_1 = arith.constant 0 : i32
    return %c0_i32, %c0_i32_0 : i32, i32
  }
  func.func @transform_6(%arg0: i32) -> (i32, i32) {
    %c0_i32 = arith.constant 0 : i32
    %c0_i32_0 = arith.constant 0 : i32
    %c0_i32_1 = arith.constant 0 : i32
    return %c0_i32, %c0_i32_0 : i32, i32
  }
  func.func @transform_7(%arg0: i32) -> (i32, i32) {
    %c0_i32 = arith.constant 0 : i32
    %c0_i32_0 = arith.constant 0 : i32
    return %c0_i32, %arg0 : i32, i32
  }
}

</mosaic_0001>

<llo_original>
// kernel: tpu_custom_call.1
$region0: #{tpu_custom_call.1}
  #allocation0 [shape = 'u32[]', space=smem, size = 0x4, offset = 0x4, fixed_abs, tag = 'smem constant byte address 0x4 - core index']
  #allocation1 [shape = 'u32[144,128]{1,0:T(1,128)}', space=vmem, size = 0x12000, scoped, tag = 'internal scratch']
  #allocation2 [shape = 'f32[1,1]{1,0:T(1,128)S(1)}', space=vmem, size = 0x200, scoped, tag = 'scoped memory for tpu_custom_call.1']
  %s0 = inlined_call_operand.vmem [shape: f32[128,4], index: 0, kind: input, shape index: {}]
  %s1 = inlined_call_operand.vmem [shape: f32[32,4], index: 1, kind: input, shape index: {}]
  %s2 = inlined_call_operand.vmem [shape: f32[32,1], index: 2, kind: input, shape index: {}]
  %s3 = inlined_call_operand.vmem [shape: f32[32,32], index: 3, kind: input, shape index: {}]
  %s4 = inlined_call_operand.vmem [shape: f32[32,1], index: 4, kind: input, shape index: {}]
  %s5 = inlined_call_operand.vmem [shape: f32[1,32], index: 5, kind: input, shape index: {}]
  %s6 = inlined_call_operand.<no memory space> [shape: f32[1,1], index: 6, kind: input, shape index: {}]
  %s7 = inlined_call_operand.hbm [shape: f32[1,128], index: 7, kind: output, shape index: {}]
  %s8 = sld [smem:[#allocation0]]
  $region38: #{tpu_custom_call.1} parent=0
    _
  %s10 = ssub.s32 1, %s8
  %s11 = scalar_select 0, %s10, %s8
  %v12 = vstv %s6
  %13 = vst [vmem:[#allocation2] sm:$0x1] %v12
  $region1: #{tpu_custom_call.1} parent=0
    #allocation3 [shape = 'u8[512]{0}', space=vmem, size = 0x400, scoped, tag = 'output window, operand 0, single buffered']
    #allocation4 [shape = 's32[1]{0}', space=sflag, size = 0x4, scoped, tag = 'scoped memory for tpu_custom_call.1']
    %14 = vsyncpa [#allocation4], 0
    // Predicated region
    $region2: #{tpu_custom_call.1} parent=1 // pred_check
      _
    $region3: #{tpu_custom_call.1} parent=1 // pred_check_branch
      %16 = sbr.rel (0) target = $region5
    $region4: #{tpu_custom_call.1} parent=1 // pred_region
      _
    $region5: #{tpu_custom_call.1} parent=1 // pred_fallthru
      _
    // Predicated region
    $region6: #{tpu_custom_call.1} parent=1 // pred_check
      _
    $region7: #{tpu_custom_call.1} parent=1 // pred_check_branch
      %18 = sbr.rel (0) target = $region9
    $region8: #{tpu_custom_call.1} parent=1 // pred_region
      _
    $region9: #{tpu_custom_call.1} parent=1 // pred_fallthru
      _
    // Predicated region
    $region10: #{tpu_custom_call.1} parent=1 // pred_check
      _
    $region11: #{tpu_custom_call.1} parent=1 // pred_check_branch
      %20 = sbr.rel (0) target = $region13
    $region12: #{tpu_custom_call.1} parent=1 // pred_region
      _
    $region13: #{tpu_custom_call.1} parent=1 // pred_fallthru
      _
    // Predicated region
    $region14: #{tpu_custom_call.1} parent=1 // pred_check
      _
    $region15: #{tpu_custom_call.1} parent=1 // pred_check_branch
      %22 = sbr.rel (0) target = $region17
    $region16: #{tpu_custom_call.1} parent=1 // pred_region
      _
    $region17: #{tpu_custom_call.1} parent=1 // pred_fallthru
      _
    // Predicated region
    $region18: #{tpu_custom_call.1} parent=1 // pred_check
      _
    $region19: #{tpu_custom_call.1} parent=1 // pred_check_branch
      %24 = sbr.rel (0) target = $region21
    $region20: #{tpu_custom_call.1} parent=1 // pred_region
      _
    $region21: #{tpu_custom_call.1} parent=1 // pred_fallthru
      _
    // Predicated region
    $region22: #{tpu_custom_call.1} parent=1 // pred_check
      _
    $region23: #{tpu_custom_call.1} parent=1 // pred_check_branch
      %26 = sbr.rel (0) target = $region25
    $region24: #{tpu_custom_call.1} parent=1 // pred_region
      _
    $region25: #{tpu_custom_call.1} parent=1 // pred_fallthru
      _
    // Predicated region
    $region26: #{tpu_custom_call.1} parent=1 // pred_check
      _
    $region27: #{tpu_custom_call.1} parent=1 // pred_check_branch
      %28 = sbr.rel (0) target = $region29
    $region28: #{tpu_custom_call.1} parent=1 // pred_region
      _
    $region29: #{tpu_custom_call.1} parent=1 // pred_fallthru
      _
    %v29 = vld [vmem:[%s1] sm:$0xff]
    %v30 = vld [vmem:[%s1 + $0x8] sm:$0xff]
    %v31 = vld [vmem:[%s1 + $0x10] sm:$0xff]
    %v32 = vld [vmem:[%s1 + $0x18] sm:$0xff]
    %v33 = vld [vmem:[%s3] sm:$0xff]
    %v34 = vld [vmem:[%s3 + $0x8] sm:$0xff]
    %v35 = vld [vmem:[%s3 + $0x10] sm:$0xff]
    %v36 = vld [vmem:[%s3 + $0x18] sm:$0xff]
    %v37 = vld [vmem:[%s5] sm:$0x1]
    %v38 = vld [vmem:[%s2] sm:$0xff]
    %v39 = vld [vmem:[%s2 + $0x8] sm:$0xff]
    %v40 = vld [vmem:[%s2 + $0x10] sm:$0xff]
    %v41 = vld [vmem:[%s2 + $0x18] sm:$0xff]
    %v42 = vld [vmem:[%s4] sm:$0xff]
    %v43 = vld [vmem:[%s4 + $0x8] sm:$0xff]
    %v44 = vld [vmem:[%s4 + $0x10] sm:$0xff]
    %v45 = vld [vmem:[%s4 + $0x18] sm:$0xff]
    %v46 = vld [vmem:[#allocation2] sm:$0x1]
    %48 = vset.pattern.permute.xlu0 0
    %49 = vperm.xlu0 %48, %v38
    %v50 = vpop.permute.xlu0 %49
    %53 = vset.pattern.permute.xlu0 0
    %54 = vperm.xlu0 %53, %v39
    %v55 = vpop.permute.xlu0 %54
    %58 = vset.pattern.permute.xlu0 0
    %59 = vperm.xlu0 %58, %v40
    %v60 = vpop.permute.xlu0 %59
    %63 = vset.pattern.permute.xlu0 0
    %64 = vperm.xlu0 %63, %v41
    %v65 = vpop.permute.xlu0 %64
    %68 = vset.pattern.permute.xlu0 0
    %69 = vperm.xlu0 %68, %v42
    %v70 = vpop.permute.xlu0 %69
    %73 = vset.pattern.permute.xlu0 0
    %74 = vperm.xlu0 %73, %v43
    %v75 = vpop.permute.xlu0 %74
    %78 = vset.pattern.permute.xlu0 0
    %79 = vperm.xlu0 %78, %v44
    %v80 = vpop.permute.xlu0 %79
    %83 = vset.pattern.permute.xlu0 0
    %84 = vperm.xlu0 %83, %v45
    %v85 = vpop.permute.xlu0 %84
    %v87 = vld [vmem:[%s0] sm:$0xff]
    %v88 = vld [vmem:[%s0 + $0x8] sm:$0xff]
    %v89 = vld [vmem:[%s0 + $0x10] sm:$0xff]
    %v90 = vld [vmem:[%s0 + $0x18] sm:$0xff]
    %v91 = vld [vmem:[%s0 + $0x20] sm:$0xff]
    %v92 = vld [vmem:[%s0 + $0x28] sm:$0xff]
    %v93 = vld [vmem:[%s0 + $0x30] sm:$0xff]
    %v94 = vld [vmem:[%s0 + $0x38] sm:$0xff]
    %v95 = vld [vmem:[%s0 + $0x40] sm:$0xff]
    %v96 = vld [vmem:[%s0 + $0x48] sm:$0xff]
    %v97 = vld [vmem:[%s0 + $0x50] sm:$0xff]
    %v98 = vld [vmem:[%s0 + $0x58] sm:$0xff]
    %v99 = vld [vmem:[%s0 + $0x60] sm:$0xff]
    %v100 = vld [vmem:[%s0 + $0x68] sm:$0xff]
    %v101 = vld [vmem:[%s0 + $0x70] sm:$0xff]
    %v102 = vld [vmem:[%s0 + $0x78] sm:$0xff]
    %vm103 = vcmask 31744
    %v105 = vsel %vm103, %v29, 0
    %v108 = vsel %vm103, %v30, 0
    %v111 = vsel %vm103, %v31, 0
    %v114 = vsel %vm103, %v32, 0
    %v117 = vsel %vm103, %v87, 0
    %v120 = vsel %vm103, %v88, 0
    %v123 = vsel %vm103, %v89, 0
    %v126 = vsel %vm103, %v90, 0
    %v129 = vsel %vm103, %v91, 0
    %v132 = vsel %vm103, %v92, 0
    %v135 = vsel %vm103, %v93, 0
    %v138 = vsel %vm103, %v94, 0
    %v141 = vsel %vm103, %v95, 0
    %v144 = vsel %vm103, %v96, 0
    %v147 = vsel %vm103, %v97, 0
    %v150 = vsel %vm103, %v98, 0
    %v153 = vsel %vm103, %v99, 0
    %v156 = vsel %vm103, %v100, 0
    %v159 = vsel %vm103, %v101, 0
    %v162 = vsel %vm103, %v102, 0
    %164 = vmatprep.subr.mxu0 0.0
    %165 = vmatpush1.xpose.msra.mxu0 %v117
    %166 = vmatprep.subr.mxu0 0.0
    %167 = vmatpush1.xpose.msra.mxu0 %v120
    %168 = vmatprep.subr.mxu0 0.0
    %169 = vmatpush1.xpose.msra.mxu0 %v123
    %170 = vmatprep.subr.mxu0 0.0
    %171 = vmatpush1.xpose.msra.mxu0 %v126
    %172 = vmatprep.subr.mxu0 0.0
    %173 = vmatpush1.xpose.msra.mxu0 %v129
    %174 = vmatprep.subr.mxu0 0.0
    %175 = vmatpush1.xpose.msra.mxu0 %v132
    %176 = vmatprep.subr.mxu0 0.0
    %177 = vmatpush1.xpose.msra.mxu0 %v135
    %178 = vmatprep.subr.mxu0 0.0
    %179 = vmatpush1.xpose.msra.mxu0 %v138
    %180 = vmatprep.subr.mxu0 0.0
    %181 = vmatpush1.xpose.msra.mxu0 %v141
    %182 = vmatprep.subr.mxu0 0.0
    %183 = vmatpush1.xpose.msra.mxu0 %v144
    %184 = vmatprep.subr.mxu0 0.0
    %185 = vmatpush1.xpose.msra.mxu0 %v147
    %186 = vmatprep.subr.mxu0 0.0
    %187 = vmatpush1.xpose.msra.mxu0 %v150
    %188 = vmatprep.subr.mxu0 0.0
    %189 = vmatpush1.xpose.msra.mxu0 %v153
    %190 = vmatprep.subr.mxu0 0.0
    %191 = vmatpush1.xpose.msra.mxu0 %v156
    %192 = vmatprep.subr.mxu0 0.0
    %193 = vmatpush1.xpose.msra.mxu0 %v159
    %194 = vmatprep.subr.mxu0 0.0
    %195 = vmatpush1.xpose.msra.mxu0 %v162
    %196 = vmatprep.subr.mxu0 0.0
    %197 = vmatpush1.xpose.msra.mxu0 0.0
    %198 = vmatprep.subr.mxu0 0.0
    %199 = vmatpush1.xpose.msra.mxu0 0.0
    %200 = vmatprep.subr.mxu0 0.0
    %201 = vmatpush1.xpose.msra.mxu0 0.0
    %202 = vmatprep.subr.mxu0 0.0
    %203 = vmatpush1.xpose.msra.mxu0 0.0
    %204 = vmatprep.subr.mxu0 0.0
    %205 = vmatpush1.xpose.msra.mxu0 0.0
    %206 = vmatprep.subr.mxu0 0.0
    %207 = vmatpush1.xpose.msra.mxu0 0.0
    %208 = vmatprep.subr.mxu0 0.0
    %209 = vmatpush1.xpose.msra.mxu0 0.0
    %210 = vmatprep.subr.mxu0 0.0
    %211 = vmatpush1.xpose.msra.mxu0 0.0
    %212 = vmatprep.subr.mxu0 0.0
    %213 = vmatpush1.xpose.msra.mxu0 0.0
    %214 = vmatprep.subr.mxu0 0.0
    %215 = vmatpush1.xpose.msra.mxu0 0.0
    %216 = vmatprep.subr.mxu0 0.0
    %217 = vmatpush1.xpose.msra.mxu0 0.0
    %218 = vmatprep.subr.mxu0 0.0
    %219 = vmatpush1.xpose.msra.mxu0 0.0
    %220 = vmatprep.subr.mxu0 0.0
    %221 = vmatpush1.xpose.msra.mxu0 0.0
    %222 = vmatprep.subr.mxu0 0.0
    %223 = vmatpush1.xpose.msra.mxu0 0.0
    %224 = vmatprep.subr.mxu0 0.0
    %225 = vmatpush1.xpose.msra.mxu0 0.0
    %226 = vmatprep.subr.mxu0 0.0
    %227 = vmatpush1.xpose.msra.mxu0 0.0
    %228 = vmatprep.mubr.f32.mxu0 0.0
    %229 = vmatmul.mubr.f32.gmra.mrb[0].mxu0 %v105
    %v230 = vpop.f32.mrb[0].mxu0
    %v231 = vadd.f32 %v50, %v230
    %v232 = vpop.f32.mrb[0].mxu0
    %233 = vmatprep.mubr.f32.mxu0 0.0
    %234 = vmatmul.mubr.f32.gmra.mrb[0].mxu0 %v108
    %v235 = vpop.f32.mrb[0].mxu0
    %v236 = vadd.f32 %v55, %v235
    %v237 = vpop.f32.mrb[0].mxu0
    %238 = vmatprep.mubr.f32.mxu0 0.0
    %239 = vmatmul.mubr.f32.gmra.mrb[0].mxu0 %v111
    %v240 = vpop.f32.mrb[0].mxu0
    %v241 = vadd.f32 %v60, %v240
    %v242 = vpop.f32.mrb[0].mxu0
    %243 = vmatprep.mubr.f32.mxu0 0.0
    %244 = vmatmul.mubr.f32.gmra.mrb[0].mxu0 %v114
    %v245 = vpop.f32.mrb[0].mxu0
    %v246 = vadd.f32 %v65, %v245
    %v247 = vpop.f32.mrb[0].mxu0
    %248 = vdwg.mxu0
    %v249 = vtanh.pop %v231
    %v250 = vtanh.pop %v236
    %v251 = vtanh.pop %v241
    %v252 = vtanh.pop %v246
    %vm253 = vcmask 261120
    %v255 = vsel %vm253, %v33, 0
    %v258 = vsel %vm253, %v34, 0
    %v261 = vsel %vm253, %v35, 0
    %v264 = vsel %vm253, %v36, 0
    %266 = vmatprep.subr.mxu0 0.0
    %267 = vmatpush1.msra.mxu0 %v249
    %268 = vmatprep.subr.mxu0 0.0
    %269 = vmatpush1.msra.mxu0 %v250
    %270 = vmatprep.subr.mxu0 0.0
    %271 = vmatpush1.msra.mxu0 %v251
    %272 = vmatprep.subr.mxu0 0.0
    %273 = vmatpush1.msra.mxu0 %v252
    %274 = vmatprep.subr.mxu0 0.0
    %275 = vmatpush1.msra.mxu0 0.0
    %276 = vmatprep.subr.mxu0 0.0
    %277 = vmatpush1.msra.mxu0 0.0
    %278 = vmatprep.subr.mxu0 0.0
    %279 = vmatpush1.msra.mxu0 0.0
    %280 = vmatprep.subr.mxu0 0.0
    %281 = vmatpush1.msra.mxu0 0.0
    %282 = vmatprep.subr.mxu0 0.0
    %283 = vmatpush1.msra.mxu0 0.0
    %284 = vmatprep.subr.mxu0 0.0
    %285 = vmatpush1.msra.mxu0 0.0
    %286 = vmatprep.subr.mxu0 0.0
    %287 = vmatpush1.msra.mxu0 0.0
    %288 = vmatprep.subr.mxu0 0.0
    %289 = vmatpush1.msra.mxu0 0.0
    %290 = vmatprep.subr.mxu0 0.0
    %291 = vmatpush1.msra.mxu0 0.0
    %292 = vmatprep.subr.mxu0 0.0
    %293 = vmatpush1.msra.mxu0 0.0
    %294 = vmatprep.subr.mxu0 0.0
    %295 = vmatpush1.msra.mxu0 0.0
    %296 = vmatprep.subr.mxu0 0.0
    %297 = vmatpush1.msra.mxu0 0.0
    %298 = vmatprep.subr.mxu0 0.0
    %299 = vmatpush1.msra.mxu0 0.0
    %300 = vmatprep.subr.mxu0 0.0
    %301 = vmatpush1.msra.mxu0 0.0
    %302 = vmatprep.subr.mxu0 0.0
    %303 = vmatpush1.msra.mxu0 0.0
    %304 = vmatprep.subr.mxu0 0.0
    %305 = vmatpush1.msra.mxu0 0.0
    %306 = vmatprep.subr.mxu0 0.0
    %307 = vmatpush1.msra.mxu0 0.0
    %308 = vmatprep.subr.mxu0 0.0
    %309 = vmatpush1.msra.mxu0 0.0
    %310 = vmatprep.subr.mxu0 0.0
    %311 = vmatpush1.msra.mxu0 0.0
    %312 = vmatprep.subr.mxu0 0.0
    %313 = vmatpush1.msra.mxu0 0.0
    %314 = vmatprep.subr.mxu0 0.0
    %315 = vmatpush1.msra.mxu0 0.0
    %316 = vmatprep.subr.mxu0 0.0
    %317 = vmatpush1.msra.mxu0 0.0
    %318 = vmatprep.subr.mxu0 0.0
    %319 = vmatpush1.msra.mxu0 0.0
    %320 = vmatprep.subr.mxu0 0.0
    %321 = vmatpush1.msra.mxu0 0.0
    %322 = vmatprep.subr.mxu0 0.0
    %323 = vmatpush1.msra.mxu0 0.0
    %324 = vmatprep.subr.mxu0 0.0
    %325 = vmatpush1.msra.mxu0 0.0
    %326 = vmatprep.subr.mxu0 0.0
    %327 = vmatpush1.msra.mxu0 0.0
    %328 = vmatprep.subr.mxu0 0.0
    %329 = vmatpush1.msra.mxu0 0.0
    %330 = vmatprep.mubr.f32.mxu0 0.0
    %331 = vmatmul.mubr.f32.gmra.mrb[0].mxu0 %v255
    %v332 = vpop.f32.mrb[0].mxu0
    %v333 = vadd.f32 %v70, %v332
    %v334 = vpop.f32.mrb[0].mxu0
    %335 = vmatprep.mubr.f32.mxu0 0.0
    %336 = vmatmul.mubr.f32.gmra.mrb[0].mxu0 %v258
    %v337 = vpop.f32.mrb[0].mxu0
    %v338 = vadd.f32 %v75, %v337
    %v339 = vpop.f32.mrb[0].mxu0
    %340 = vmatprep.mubr.f32.mxu0 0.0
    %341 = vmatmul.mubr.f32.gmra.mrb[0].mxu0 %v261
    %v342 = vpop.f32.mrb[0].mxu0
    %v343 = vadd.f32 %v80, %v342
    %v344 = vpop.f32.mrb[0].mxu0
    %345 = vmatprep.mubr.f32.mxu0 0.0
    %346 = vmatmul.mubr.f32.gmra.mrb[0].mxu0 %v264
    %v347 = vpop.f32.mrb[0].mxu0
    %v348 = vadd.f32 %v85, %v347
    %v349 = vpop.f32.mrb[0].mxu0
    %350 = vdwg.mxu0
    %v351 = vtanh.pop %v333
    %v352 = vtanh.pop %v338
    %v353 = vtanh.pop %v343
    %v354 = vtanh.pop %v348
    %356 = vset.pattern.permute.xlu0 0
    %357 = vperm.xlu0 %356, %v46
    %v358 = vpop.permute.xlu0 %357
    %v360 = vlaneseq
    %v361 = vshrl.u32 %v360, 7
    %v362 = vsub.s32 0, %v361
    %v363 = vrot.slane %v358, %v362
    %v365 = vsel %vm253, %v37, 0
    %367 = vmatprep.subr.mxu0 0.0
    %368 = vmatpush1.msra.mxu0 %v351
    %369 = vmatprep.subr.mxu0 0.0
    %370 = vmatpush1.msra.mxu0 %v352
    %371 = vmatprep.subr.mxu0 0.0
    %372 = vmatpush1.msra.mxu0 %v353
    %373 = vmatprep.subr.mxu0 0.0
    %374 = vmatpush1.msra.mxu0 %v354
    %375 = vmatprep.subr.mxu0 0.0
    %376 = vmatpush1.msra.mxu0 0.0
    %377 = vmatprep.subr.mxu0 0.0
    %378 = vmatpush1.msra.mxu0 0.0
    %379 = vmatprep.subr.mxu0 0.0
    %380 = vmatpush1.msra.mxu0 0.0
    %381 = vmatprep.subr.mxu0 0.0
    %382 = vmatpush1.msra.mxu0 0.0
    %383 = vmatprep.subr.mxu0 0.0
    %384 = vmatpush1.msra.mxu0 0.0
    %385 = vmatprep.subr.mxu0 0.0
    %386 = vmatpush1.msra.mxu0 0.0
    %387 = vmatprep.subr.mxu0 0.0
    %388 = vmatpush1.msra.mxu0 0.0
    %389 = vmatprep.subr.mxu0 0.0
    %390 = vmatpush1.msra.mxu0 0.0
    %391 = vmatprep.subr.mxu0 0.0
    %392 = vmatpush1.msra.mxu0 0.0
    %393 = vmatprep.subr.mxu0 0.0
    %394 = vmatpush1.msra.mxu0 0.0
    %395 = vmatprep.subr.mxu0 0.0
    %396 = vmatpush1.msra.mxu0 0.0
    %397 = vmatprep.subr.mxu0 0.0
    %398 = vmatpush1.msra.mxu0 0.0
    %399 = vmatprep.subr.mxu0 0.0
    %400 = vmatpush1.msra.mxu0 0.0
    %401 = vmatprep.subr.mxu0 0.0
    %402 = vmatpush1.msra.mxu0 0.0
    %403 = vmatprep.subr.mxu0 0.0
    %404 = vmatpush1.msra.mxu0 0.0
    %405 = vmatprep.subr.mxu0 0.0
    %406 = vmatpush1.msra.mxu0 0.0
    %407 = vmatprep.subr.mxu0 0.0
    %408 = vmatpush1.msra.mxu0 0.0
    %409 = vmatprep.subr.mxu0 0.0
    %410 = vmatpush1.msra.mxu0 0.0
    %411 = vmatprep.subr.mxu0 0.0
    %412 = vmatpush1.msra.mxu0 0.0
    %413 = vmatprep.subr.mxu0 0.0
    %414 = vmatpush1.msra.mxu0 0.0
    %415 = vmatprep.subr.mxu0 0.0
    %416 = vmatpush1.msra.mxu0 0.0
    %417 = vmatprep.subr.mxu0 0.0
    %418 = vmatpush1.msra.mxu0 0.0
    %419 = vmatprep.subr.mxu0 0.0
    %420 = vmatpush1.msra.mxu0 0.0
    %421 = vmatprep.subr.mxu0 0.0
    %422 = vmatpush1.msra.mxu0 0.0
    %423 = vmatprep.subr.mxu0 0.0
    %424 = vmatpush1.msra.mxu0 0.0
    %425 = vmatprep.subr.mxu0 0.0
    %426 = vmatpush1.msra.mxu0 0.0
    %427 = vmatprep.subr.mxu0 0.0
    %428 = vmatpush1.msra.mxu0 0.0
    %429 = vmatprep.subr.mxu0 0.0
    %430 = vmatpush1.msra.mxu0 0.0
    %431 = vmatprep.mubr.f32.mxu0 0.0
    %432 = vmatmul.mubr.f32.gmra.mrb[0].mxu0 %v365
    %v433 = vpop.f32.mrb[0].mxu0
    %v434 = vadd.f32 %v363, %v433
    %v435 = vpop.f32.mrb[0].mxu0
    %436 = vdwg.mxu0
    %437 = vst [vmem:[#allocation3] sm:$0x1] %v434
    // Predicated region
    $region30: #{tpu_custom_call.1} parent=1 // pred_check
      _
    $region31: #{tpu_custom_call.1} parent=1 // pred_check_branch
      %439 = sbr.rel (0) target = $region33
    $region32: #{tpu_custom_call.1} parent=1 // pred_region
      %s441 = ssub.s32 16, 16
      %442 = vsyncadd [#allocation4], %s441
      %s444 = sshll.u32 [#allocation3], 4
      %s445 = int_to_ptr.vmem [resolvable:$true] %s444
      %447 = dma.vmem_to_hbm [thread:$0]  %s445, 16, %s7, [#allocation4]
    $region33: #{tpu_custom_call.1} parent=1 // pred_fallthru
      _
    // Predicated region
    $region34: #{tpu_custom_call.1} parent=1 // pred_check
      _
    $region35: #{tpu_custom_call.1} parent=1 // pred_check_branch
      %449 = sbr.rel (0) target = $region37
    $region36: #{tpu_custom_call.1} parent=1 // pred_region
      %450 = dma.done [#allocation4], 16
    $region37: #{tpu_custom_call.1} parent=1 // pred_fallthru
      _
    %451 = vsyncpa [#allocation4], 1

</llo_original>
